<compile_context>
chip_gen: v7x
topology: tpu7x:2x2x1
jax: 0.10.0
libtpu: 0.0.40
codegen_flags: <defaults>
</compile_context>

<pallas_src>
import functools
import math

import jax
import jax.numpy as jnp
import numpy as np
from jax.experimental import pallas as pl
from jax.experimental.pallas import tpu as pltpu


def _round_up(a, m):
    return (a + m - 1) // m * m


def _fits_kernel(x_ref, f_ref, cw_ref, cb_ref, lowvar_ref, mean_ref, *, seq_len):
    """One column tile.  Layout: (time, lanes); time is the DFT axis."""
    x = x_ref[...]                                     # (L, Tn) f32
    # One-pass moments: single elementwise sweep before the first matmul.
    s1 = jnp.sum(x, axis=0, keepdims=True)             # (1, Tn)
    mean = s1 * (1.0 / seq_len)
    s2 = jnp.sum(x * x, axis=0, keepdims=True)
    # torch.var default is unbiased (divide by L-1); +1e-5 matches the module.
    var = (s2 - s1 * mean) * (1.0 / (seq_len - 1)) + 1e-5
    inv_std = jax.lax.rsqrt(var)                       # EUP slot (cheap)
    std = var * inv_std                                # == sqrt(var)
    xn = ((x - mean) * inv_std).astype(jnp.bfloat16)   # (L, Tn)

    # rfft (first Fin bins, stacked re/im) as one block matmul:   (Kp, Tn)
    spec = jnp.dot(f_ref[...], xn, preferred_element_type=jnp.float32)

    # Folded (zero-padded irfft ∘ complex Linear):                (Lout, Tn)
    # length_ratio, 1/n_out and Hermitian weights are folded into CW/cb host-side.
    low = jnp.dot(cw_ref[...], spec.astype(jnp.bfloat16),
                  preferred_element_type=jnp.float32) + cb_ref[...]

    lowvar_ref[...] = low * std                        # low_xy * sqrt(var)
    mean_ref[...] = mean                               # tiny; wrapper adds it back


def _pick_tile_n(n_pad):
    """Largest 128-multiple power-of-two divisor of n_pad, capped at 1024,
    preferring >= 2 grid steps so v7x's two TensorCores both get work."""
    tile_n = 128
    for t in (1024, 512, 256, 128):
        if n_pad % t == 0:
            tile_n = t
            break
    if n_pad // tile_n < 2:
        for t in (512, 256, 128):
            if n_pad % t == 0 and n_pad // t >= 2:
                tile_n = t
                break
    return tile_n


def fits_forward(x, params, *, seq_len, pred_len, cut_freq, individual=False):
    # TODO(synk): individual=True not implemented (needs per-channel weights).
    assert not individual, "only individual=False (shared complex Linear) supported"
    B, L, C = x.shape
    assert L == seq_len and seq_len > 1
    assert cut_freq <= seq_len // 2 + 1, "cut_freq exceeds rfft bin count"
    w_re, w_im, b_re, b_im = params

    length_ratio = (seq_len + pred_len) / seq_len
    f_out = int(cut_freq * length_ratio)
    full_len = int((seq_len + pred_len) / 2 + 1)
    n_out = 2 * (full_len - 1)          # torch.fft.irfft default output length
    assert f_out <= full_len, "f_out exceeds irfft half-spectrum length"
    assert w_re.shape == (f_out, cut_freq)

    # ---- host-side constants (numpy float64, folded once) -------------------
    n = np.arange(seq_len)
    k = np.arange(cut_freq)
    ang = 2.0 * np.pi * np.outer(k, n) / seq_len                 # (Fin, L)
    f_blk = np.concatenate([np.cos(ang), -np.sin(ang)], axis=0)  # (2Fin, L)

    ko = np.arange(f_out)
    no = np.arange(n_out)
    w = np.full((f_out,), 2.0)
    w[0] = 1.0
    if n_out % 2 == 0 and f_out - 1 == n_out // 2:
        w[-1] = 1.0                                              # Nyquist bin
    ang_o = 2.0 * np.pi * np.outer(no, ko) / n_out               # (Lout, Fout)
    scale = w[None, :] * (length_ratio / n_out)                  # fold length_ratio, 1/n
    c_blk = np.concatenate([np.cos(ang_o) * scale,
                            -np.sin(ang_o) * scale], axis=1)     # (Lout, 2Fout)

    w_re_np = np.asarray(w_re, np.float64)
    w_im_np = np.asarray(w_im, np.float64)
    b_re_np = np.asarray(b_re, np.float64)
    b_im_np = np.asarray(b_im, np.float64)
    w_blk = np.block([[w_re_np, -w_im_np],
                      [w_im_np, w_re_np]])                       # (2Fout, 2Fin)
    b_blk = np.concatenate([b_re_np, b_im_np]).reshape(-1, 1)    # (2Fout, 1)

    # Fold the complex Linear into the irfft matrix (review item 1).
    cw = c_blk @ w_blk                                           # (Lout, 2Fin)
    cb = c_blk @ b_blk                                           # (Lout, 1)

    # Pad the contraction dim to a multiple of 16 (bf16 sublane pack).
    k_in = 2 * cut_freq
    k_pad = _round_up(k_in, 16)
    if k_pad != k_in:
        f_blk = np.pad(f_blk, ((0, k_pad - k_in), (0, 0)))
        cw = np.pad(cw, ((0, 0), (0, k_pad - k_in)))

    f_blk = jnp.asarray(f_blk, jnp.bfloat16)                     # (Kp, L)
    cw = jnp.asarray(cw, jnp.bfloat16)                           # (Lout, Kp)
    cb = jnp.asarray(cb, jnp.float32)                            # (Lout, 1)

    # ---- lane-flatten (B, L, C) -> (L, B*C); pad columns to a 128 multiple --
    n_cols = B * C
    n_pad = _round_up(n_cols, 128)
    tile_n = _pick_tile_n(n_pad)
    num_tiles = n_pad // tile_n

    x_flat = jnp.transpose(x, (1, 0, 2)).reshape(seq_len, n_cols).astype(jnp.float32)
    if n_pad != n_cols:
        x_flat = jnp.pad(x_flat, ((0, 0), (0, n_pad - n_cols)))

    kernel = functools.partial(_fits_kernel, seq_len=seq_len)

    def const_spec(shape):
        return pl.BlockSpec(shape, lambda j: (0,) * len(shape))

    # Explicit VMEM budget: double-buffered per-step blocks + constants + slack.
    const_bytes = f_blk.size * 2 + cw.size * 2 + cb.size * 4
    per_step_bytes = (seq_len + n_out + 1) * tile_n * 4
    vmem_limit = int(min(48 << 20,
                         max(32 << 20, 2 * (per_step_bytes + const_bytes) + (4 << 20))))

    low_var_flat, mean_flat = pl.pallas_call(
        kernel,
        out_shape=(jax.ShapeDtypeStruct((n_out, n_pad), jnp.float32),
                   jax.ShapeDtypeStruct((1, n_pad), jnp.float32)),
        grid_spec=pltpu.PrefetchScalarGridSpec(
            num_scalar_prefetch=0,
            grid=(num_tiles,),
            in_specs=[
                pl.BlockSpec((seq_len, tile_n), lambda j: (0, j)),  # x columns
                const_spec((k_pad, seq_len)),                       # F_blk
                const_spec((n_out, k_pad)),                         # CW
                const_spec((n_out, 1)),                             # cb
            ],
            out_specs=[
                pl.BlockSpec((n_out, tile_n), lambda j: (0, j)),    # low_var
                pl.BlockSpec((1, tile_n), lambda j: (0, j)),        # mean
            ],
        ),
        compiler_params=pltpu.CompilerParams(
            dimension_semantics=("parallel",),
            vmem_limit_bytes=vmem_limit),
    )(x_flat, f_blk, cw, cb)

    # Unpad; xy = low_var + mean fuses into the output transpose (no xy re-read).
    low_var_flat = low_var_flat[:, :n_cols]
    mean_flat = mean_flat[:, :n_cols]
    xy_flat = low_var_flat + mean_flat

    xy = jnp.transpose(xy_flat.reshape(n_out, B, C), (1, 0, 2))
    low_var = jnp.transpose(low_var_flat.reshape(n_out, B, C), (1, 0, 2))
    return xy, low_var


def fits_reference(x, params, *, seq_len, pred_len, cut_freq):
    """Pure-JAX reference using jnp.fft (mirrors the PyTorch forward)."""
    w_re, w_im, b_re, b_im = params
    length_ratio = (seq_len + pred_len) / seq_len
    f_out = int(cut_freq * length_ratio)
    full_len = int((seq_len + pred_len) / 2 + 1)
    n_out = 2 * (full_len - 1)

    mean = jnp.mean(x, axis=1, keepdims=True)
    xc = x - mean
    var = jnp.var(xc, axis=1, keepdims=True, ddof=1) + 1e-5
    xn = xc / jnp.sqrt(var)

    spec = jnp.fft.rfft(xn, axis=1)[:, :cut_freq, :]              # (B, Fin, C)
    W = w_re + 1j * w_im
    bias = (b_re + 1j * b_im)[None, :, None]
    y = jnp.einsum("of,bfc->boc", W, spec) + bias                 # (B, Fout, C)

    pad = jnp.zeros((x.shape[0], full_len - f_out, x.shape[2]), dtype=y.dtype)
    spec_full = jnp.concatenate([y, pad], axis=1)
    low = jnp.fft.irfft(spec_full, n=n_out, axis=1) * length_ratio
    low_var = low * jnp.sqrt(var)
    return low_var + mean, low_var


if __name__ == "__main__":
    seq_len, pred_len, enc_in, cut_freq = 16, 8, 4, 5
    B = 2

    length_ratio = (seq_len + pred_len) / seq_len
    f_out = int(cut_freq * length_ratio)

    key = jax.random.PRNGKey(0)
    k1, k2, k3, k4, kx = jax.random.split(key, 5)
    bound = 1.0 / math.sqrt(cut_freq)
    w_re = jax.random.uniform(k1, (f_out, cut_freq), jnp.float32, -bound, bound)
    w_im = jax.random.uniform(k2, (f_out, cut_freq), jnp.float32, -bound, bound)
    b_re = jax.random.uniform(k3, (f_out,), jnp.float32, -bound, bound)
    b_im = jax.random.uniform(k4, (f_out,), jnp.float32, -bound, bound)
    params = (w_re, w_im, b_re, b_im)

    x = jax.random.normal(kx, (B, seq_len, enc_in), jnp.float32)

    xy, low_var = fits_forward(x, params, seq_len=seq_len, pred_len=pred_len,
                               cut_freq=cut_freq)
    jax.block_until_ready((xy, low_var))

    xy_ref, low_ref = fits_reference(x, params, seq_len=seq_len,
                                     pred_len=pred_len, cut_freq=cut_freq)
    assert xy.shape == (B, seq_len + pred_len, enc_in)
    assert low_var.shape == (B, seq_len + pred_len, enc_in)
    assert jnp.allclose(xy, xy_ref, atol=5e-2, rtol=5e-2), \
        float(jnp.max(jnp.abs(xy - xy_ref)))
    assert jnp.allclose(low_var, low_ref, atol=5e-2, rtol=5e-2), \
        float(jnp.max(jnp.abs(low_var - low_ref)))

    print("KERNEL_OK")
</pallas_src>

<mosaic_0001>
module attributes {stable_mosaic.version = 11 : i64} {
  func.func @_fits_kernel(%arg0: i32, %arg1: memref<16x128xf32, #tpu.memory_space<vmem>>, %arg2: memref<16x16xbf16, #tpu.memory_space<vmem>>, %arg3: memref<24x16xbf16, #tpu.memory_space<vmem>>, %arg4: memref<24x1xf32, #tpu.memory_space<vmem>>, %arg5: memref<24x128xf32, #tpu.memory_space<vmem>>, %arg6: memref<1x128xf32, #tpu.memory_space<vmem>>) attributes {dimension_semantics = [#tpu.dimension_semantics<parallel>], iteration_bounds = array<i64: 1>, scalar_prefetch = 0 : i64, scratch_operands = 0 : i64, tpu.core_type = #tpu.core_type<tc>, window_params = [{transform_indices = @transform_0, window_bounds = array<i64: 16, 128>}, {pipeline_mode = #tpu.pipeline_mode<synchronous>, transform_indices = @transform_1, window_bounds = array<i64: 16, 16>}, {pipeline_mode = #tpu.pipeline_mode<synchronous>, transform_indices = @transform_2, window_bounds = array<i64: 24, 16>}, {pipeline_mode = #tpu.pipeline_mode<synchronous>, transform_indices = @transform_3, window_bounds = array<i64: 24, 1>}, {transform_indices = @transform_4, window_bounds = array<i64: 24, 128>}, {transform_indices = @transform_5, window_bounds = array<i64: 1, 128>}]} {
    %c0 = arith.constant 0 : index
    %c0_0 = arith.constant 0 : index
    %0 = vector.load %arg1[%c0, %c0_0] : memref<16x128xf32, #tpu.memory_space<vmem>>, vector<16x128xf32>
    %cst = arith.constant dense<0.000000e+00> : vector<128xf32>
    %1 = vector.multi_reduction <add>, %0, %cst [0] : vector<16x128xf32> to vector<128xf32>
    %2 = vector.shape_cast %1 : vector<128xf32> to vector<1x128xf32>
    %cst_1 = arith.constant 6.250000e-02 : f32
    %3 = vector.broadcast %cst_1 : f32 to vector<1x128xf32>
    %4 = arith.mulf %2, %3 : vector<1x128xf32>
    %5 = arith.mulf %0, %0 : vector<16x128xf32>
    %cst_2 = arith.constant dense<0.000000e+00> : vector<128xf32>
    %6 = vector.multi_reduction <add>, %5, %cst_2 [0] : vector<16x128xf32> to vector<128xf32>
    %7 = vector.shape_cast %6 : vector<128xf32> to vector<1x128xf32>
    %8 = arith.mulf %2, %4 : vector<1x128xf32>
    %9 = arith.subf %7, %8 : vector<1x128xf32>
    %cst_3 = arith.constant 0.0666666701 : f32
    %10 = vector.broadcast %cst_3 : f32 to vector<1x128xf32>
    %11 = arith.mulf %9, %10 : vector<1x128xf32>
    %cst_4 = arith.constant 9.99999974E-6 : f32
    %12 = vector.broadcast %cst_4 : f32 to vector<1x128xf32>
    %13 = arith.addf %11, %12 : vector<1x128xf32>
    %14 = math.rsqrt %13 : vector<1x128xf32>
    %15 = arith.mulf %13, %14 : vector<1x128xf32>
    %16 = vector.broadcast %4 : vector<1x128xf32> to vector<16x128xf32>
    %17 = arith.subf %0, %16 : vector<16x128xf32>
    %18 = vector.broadcast %14 : vector<1x128xf32> to vector<16x128xf32>
    %19 = arith.mulf %17, %18 : vector<16x128xf32>
    %20 = arith.truncf %19 : vector<16x128xf32> to vector<16x128xbf16>
    %c0_5 = arith.constant 0 : index
    %c0_6 = arith.constant 0 : index
    %21 = vector.load %arg2[%c0_5, %c0_6] : memref<16x16xbf16, #tpu.memory_space<vmem>>, vector<16x16xbf16>
    %cst_7 = arith.constant dense<0.000000e+00> : vector<16x128xf32>
    %22 = tpu.matmul %21, %20, %cst_7 {dimension_numbers = #tpu.dot_dimension_numbers<[1], [0], [0], [1], [0, 0, 1, 1], [], []>} : vector<16x16xbf16>, vector<16x128xbf16>, vector<16x128xf32> -> vector<16x128xf32>
    %c0_8 = arith.constant 0 : index
    %c0_9 = arith.constant 0 : index
    %23 = vector.load %arg3[%c0_8, %c0_9] : memref<24x16xbf16, #tpu.memory_space<vmem>>, vector<24x16xbf16>
    %24 = arith.truncf %22 : vector<16x128xf32> to vector<16x128xbf16>
    %cst_10 = arith.constant dense<0.000000e+00> : vector<24x128xf32>
    %25 = tpu.matmul %23, %24, %cst_10 {dimension_numbers = #tpu.dot_dimension_numbers<[1], [0], [0], [1], [0, 0, 1, 1], [], []>} : vector<24x16xbf16>, vector<16x128xbf16>, vector<24x128xf32> -> vector<24x128xf32>
    %c0_11 = arith.constant 0 : index
    %c0_12 = arith.constant 0 : index
    %26 = vector.load %arg4[%c0_11, %c0_12] : memref<24x1xf32, #tpu.memory_space<vmem>>, vector<24x1xf32>
    %27 = vector.broadcast %26 : vector<24x1xf32> to vector<24x128xf32>
    %28 = arith.addf %25, %27 : vector<24x128xf32>
    %29 = vector.broadcast %15 : vector<1x128xf32> to vector<24x128xf32>
    %30 = arith.mulf %28, %29 : vector<24x128xf32>
    %c0_13 = arith.constant 0 : index
    %c0_14 = arith.constant 0 : index
    %31 = vector.load %arg5[%c0_13, %c0_14] : memref<24x128xf32, #tpu.memory_space<vmem>>, vector<24x128xf32>
    tpu.vector_store %arg5[%c0_13, %c0_14], %30 {strides = array<i32>} : memref<24x128xf32, #tpu.memory_space<vmem>>, vector<24x128xf32>,
    %c0_15 = arith.constant 0 : index
    %c0_16 = arith.constant 0 : index
    %32 = vector.load %arg6[%c0_15, %c0_16] : memref<1x128xf32, #tpu.memory_space<vmem>>, vector<1x128xf32>
    tpu.vector_store %arg6[%c0_15, %c0_16], %4 {strides = array<i32>} : memref<1x128xf32, #tpu.memory_space<vmem>>, vector<1x128xf32>,
    return
  }
  func.func @transform_0(%arg0: i32) -> (i32, i32) {
    %c0_i32 = arith.constant 0 : i32
    %c0_i32_0 = arith.constant 0 : i32
    return %c0_i32, %arg0 : i32, i32
  }
  func.func @transform_1(%arg0: i32) -> (i32, i32) {
    %c0_i32 = arith.constant 0 : i32
    %c0_i32_0 = arith.constant 0 : i32
    %c0_i32_1 = arith.constant 0 : i32
    return %c0_i32, %c0_i32_0 : i32, i32
  }
  func.func @transform_2(%arg0: i32) -> (i32, i32) {
    %c0_i32 = arith.constant 0 : i32
    %c0_i32_0 = arith.constant 0 : i32
    %c0_i32_1 = arith.constant 0 : i32
    return %c0_i32, %c0_i32_0 : i32, i32
  }
  func.func @transform_3(%arg0: i32) -> (i32, i32) {
    %c0_i32 = arith.constant 0 : i32
    %c0_i32_0 = arith.constant 0 : i32
    %c0_i32_1 = arith.constant 0 : i32
    return %c0_i32, %c0_i32_0 : i32, i32
  }
  func.func @transform_4(%arg0: i32) -> (i32, i32) {
    %c0_i32 = arith.constant 0 : i32
    %c0_i32_0 = arith.constant 0 : i32
    return %c0_i32, %arg0 : i32, i32
  }
  func.func @transform_5(%arg0: i32) -> (i32, i32) {
    %c0_i32 = arith.constant 0 : i32
    %c0_i32_0 = arith.constant 0 : i32
    return %c0_i32, %arg0 : i32, i32
  }
}

</mosaic_0001>

<llo_original>
// kernel: tpu_custom_call.1
$region0: #{tpu_custom_call.1}
  #allocation0 [shape = 'u32[]', space=smem, size = 0x4, offset = 0x4, fixed_abs, tag = 'smem constant byte address 0x4 - core index']
  #allocation1 [shape = 'u32[144,128]{1,0:T(1,128)}', space=vmem, size = 0x12000, scoped, tag = 'internal scratch']
  %s0 = inlined_call_operand.vmem [shape: f32[16,128], index: 0, kind: input, shape index: {}]
  %s1 = inlined_call_operand.vmem [shape: bf16[16,16], index: 1, kind: input, shape index: {}]
  %s2 = inlined_call_operand.vmem [shape: bf16[24,16], index: 2, kind: input, shape index: {}]
  %s3 = inlined_call_operand.vmem [shape: f32[24,1], index: 3, kind: input, shape index: {}]
  %s4 = inlined_call_operand.hbm [shape: f32[24,128], index: 4, kind: output, shape index: {0}]
  %s5 = inlined_call_operand.hbm [shape: f32[1,128], index: 5, kind: output, shape index: {1}]
  %6 = xla_tuple %s4, %s5
  %s7 = sld [smem:[#allocation0]]
  $region34: #{tpu_custom_call.1} parent=0
    _
  %s9 = ssub.s32 1, %s7
  %s10 = scalar_select 0, %s9, %s7
  $region1: #{tpu_custom_call.1} parent=0
    #allocation2 [shape = 'u8[12288]{0}', space=vmem, size = 0x3000, scoped, tag = 'output window, operand 0, single buffered']
    #allocation3 [shape = 's32[1]{0}', space=sflag, size = 0x4, scoped, tag = 'scoped memory for tpu_custom_call.1']
    #allocation4 [shape = 'u8[512]{0}', space=vmem, size = 0x400, scoped, tag = 'output window, operand 1, single buffered']
    #allocation5 [shape = 's32[1]{0}', space=sflag, size = 0x4, scoped, tag = 'scoped memory for tpu_custom_call.1']
    %11 = vsyncpa [#allocation3], 0
    %12 = vsyncpa [#allocation5], 0
    // Predicated region
    $region2: #{tpu_custom_call.1} parent=1 // pred_check
      _
    $region3: #{tpu_custom_call.1} parent=1 // pred_check_branch
      %14 = sbr.rel (0) target = $region5
    $region4: #{tpu_custom_call.1} parent=1 // pred_region
      _
    $region5: #{tpu_custom_call.1} parent=1 // pred_fallthru
      _
    // Predicated region
    $region6: #{tpu_custom_call.1} parent=1 // pred_check
      _
    $region7: #{tpu_custom_call.1} parent=1 // pred_check_branch
      %16 = sbr.rel (0) target = $region9
    $region8: #{tpu_custom_call.1} parent=1 // pred_region
      _
    $region9: #{tpu_custom_call.1} parent=1 // pred_fallthru
      _
    // Predicated region
    $region10: #{tpu_custom_call.1} parent=1 // pred_check
      _
    $region11: #{tpu_custom_call.1} parent=1 // pred_check_branch
      %18 = sbr.rel (0) target = $region13
    $region12: #{tpu_custom_call.1} parent=1 // pred_region
      _
    $region13: #{tpu_custom_call.1} parent=1 // pred_fallthru
      _
    // Predicated region
    $region14: #{tpu_custom_call.1} parent=1 // pred_check
      _
    $region15: #{tpu_custom_call.1} parent=1 // pred_check_branch
      %20 = sbr.rel (0) target = $region17
    $region16: #{tpu_custom_call.1} parent=1 // pred_region
      _
    $region17: #{tpu_custom_call.1} parent=1 // pred_fallthru
      _
    %v22 = vld [vmem:[%s0] sm:$0xff]
    %v23 = vld [vmem:[%s0 + $0x8] sm:$0xff]
    %v24 = vadd.f32 %v22, %v23
    %v25 = vrot.slane %v24, 4
    %v26 = vadd.f32 %v24, %v25
    %v27 = vrot.slane %v26, 2
    %v28 = vadd.f32 %v26, %v27
    %v29 = vrot.slane %v28, 1
    %v30 = vadd.f32 %v28, %v29
    %v31 = vmul.f32 %v30, 0.0625
    %v32 = vmul.f32 %v22, %v22
    %v33 = vmul.f32 %v23, %v23
    %v34 = vadd.f32 %v32, %v33
    %v35 = vrot.slane %v34, 4
    %v36 = vadd.f32 %v34, %v35
    %v37 = vrot.slane %v36, 2
    %v38 = vadd.f32 %v36, %v37
    %v39 = vrot.slane %v38, 1
    %v40 = vadd.f32 %v38, %v39
    %v41 = vmul.f32 %v30, %v31
    %v42 = vsub.f32 %v40, %v41
    %v43 = vmul.f32 %v42, 0.06666667
    %v44 = vadd.f32 %v43, 1e-05
    %v45 = vrsqrt.pop %v44
    %v46 = vmul.f32 %v44, %v45
    %v47 = vsub.f32 %v22, %v31
    %v48 = vsub.f32 %v23, %v31
    %v49 = vmul.f32 %v47, %v45
    %v50 = vmul.f32 %v48, %v45
    %v51 = vpack.c.bf16 %v50, %v49
    %v52 = vld [vmem:[%s1] sm:$0xf]
    %v53 = vld [vmem:[%s1 + $0x4] sm:$0xf]
    %v56 = vunpack.c.l.b16 %v52
    %v57 = vunpack.c.l.b16 %v53
    %v58 = vpack.c.b16 %v57, %v56
    %vm59 = vcmask 130048
    %v61 = vsel %vm59, %v58, 0
    %63 = vmatprep.subr.bf16.mxu0 0
    %64 = vmatpush1.bf16.msra.mxu0 %v51
    %65 = vmatprep.subr.bf16.mxu0 0
    %66 = vmatpush1.bf16.msra.mxu0 0
    %67 = vmatprep.subr.bf16.mxu0 0
    %68 = vmatpush1.bf16.msra.mxu0 0
    %69 = vmatprep.subr.bf16.mxu0 0
    %70 = vmatpush1.bf16.msra.mxu0 0
    %71 = vmatprep.subr.bf16.mxu0 0
    %72 = vmatpush1.bf16.msra.mxu0 0
    %73 = vmatprep.subr.bf16.mxu0 0
    %74 = vmatpush1.bf16.msra.mxu0 0
    %75 = vmatprep.subr.bf16.mxu0 0
    %76 = vmatpush1.bf16.msra.mxu0 0
    %77 = vmatprep.subr.bf16.mxu0 0
    %78 = vmatpush1.bf16.msra.mxu0 0
    %79 = vmatprep.subr.bf16.mxu0 0
    %80 = vmatpush1.bf16.msra.mxu0 0
    %81 = vmatprep.subr.bf16.mxu0 0
    %82 = vmatpush1.bf16.msra.mxu0 0
    %83 = vmatprep.subr.bf16.mxu0 0
    %84 = vmatpush1.bf16.msra.mxu0 0
    %85 = vmatprep.subr.bf16.mxu0 0
    %86 = vmatpush1.bf16.msra.mxu0 0
    %87 = vmatprep.subr.bf16.mxu0 0
    %88 = vmatpush1.bf16.msra.mxu0 0
    %89 = vmatprep.subr.bf16.mxu0 0
    %90 = vmatpush1.bf16.msra.mxu0 0
    %91 = vmatprep.subr.bf16.mxu0 0
    %92 = vmatpush1.bf16.msra.mxu0 0
    %93 = vmatprep.subr.bf16.mxu0 0
    %94 = vmatpush1.bf16.msra.mxu0 0
    %95 = vmatprep.mubr.bf16.mxu0 0
    %96 = vmatmul.mubr.bf16.gmra.mrb[0].mxu0 %v61
    %v97 = vpop.f32.mrb[0].mxu0
    %v98 = vadd.f32 0.0, %v97
    %v99 = vpop.f32.mrb[0].mxu0
    %v100 = vpop.f32.mrb[0].mxu0
    %v101 = vadd.f32 0.0, %v100
    %v102 = vpop.f32.mrb[0].mxu0
    %103 = vdwg.mxu0
    %v104 = vld [vmem:[%s2] sm:$0xf]
    %v105 = vld [vmem:[%s2 + $0x4] sm:$0xf]
    %v106 = vld [vmem:[%s2 + $0x8] sm:$0xf]
    %v107 = vpack.c.bf16 %v101, %v98
    %v108 = vld [vmem:[%s3] sm:$0xff]
    %v109 = vld [vmem:[%s3 + $0x8] sm:$0xff]
    %v110 = vld [vmem:[%s3 + $0x10] sm:$0xff]
    %112 = vset.pattern.permute.xlu0 0
    %113 = vperm.xlu0 %112, %v108
    %v114 = vpop.permute.xlu0 %113
    %117 = vset.pattern.permute.xlu0 0
    %118 = vperm.xlu0 %117, %v109
    %v119 = vpop.permute.xlu0 %118
    %122 = vset.pattern.permute.xlu0 0
    %123 = vperm.xlu0 %122, %v110
    %v124 = vpop.permute.xlu0 %123
    %v129 = vunpack.c.l.b16 %v104
    %v130 = vunpack.c.l.b16 %v105
    %v131 = vunpack.c.l.b16 %v106
    %v132 = vpack.c.b16 %v130, %v129
    %v133 = vpack.c.b16 %v131, %v131
    %v135 = vsel %vm59, %v132, 0
    %v138 = vsel %vm59, %v133, 0
    %140 = vmatprep.subr.bf16.mxu0 0
    %141 = vmatpush1.bf16.msra.mxu0 %v107
    %142 = vmatprep.subr.bf16.mxu0 0
    %143 = vmatpush1.bf16.msra.mxu0 0
    %144 = vmatprep.subr.bf16.mxu0 0
    %145 = vmatpush1.bf16.msra.mxu0 0
    %146 = vmatprep.subr.bf16.mxu0 0
    %147 = vmatpush1.bf16.msra.mxu0 0
    %148 = vmatprep.subr.bf16.mxu0 0
    %149 = vmatpush1.bf16.msra.mxu0 0
    %150 = vmatprep.subr.bf16.mxu0 0
    %151 = vmatpush1.bf16.msra.mxu0 0
    %152 = vmatprep.subr.bf16.mxu0 0
    %153 = vmatpush1.bf16.msra.mxu0 0
    %154 = vmatprep.subr.bf16.mxu0 0
    %155 = vmatpush1.bf16.msra.mxu0 0
    %156 = vmatprep.subr.bf16.mxu0 0
    %157 = vmatpush1.bf16.msra.mxu0 0
    %158 = vmatprep.subr.bf16.mxu0 0
    %159 = vmatpush1.bf16.msra.mxu0 0
    %160 = vmatprep.subr.bf16.mxu0 0
    %161 = vmatpush1.bf16.msra.mxu0 0
    %162 = vmatprep.subr.bf16.mxu0 0
    %163 = vmatpush1.bf16.msra.mxu0 0
    %164 = vmatprep.subr.bf16.mxu0 0
    %165 = vmatpush1.bf16.msra.mxu0 0
    %166 = vmatprep.subr.bf16.mxu0 0
    %167 = vmatpush1.bf16.msra.mxu0 0
    %168 = vmatprep.subr.bf16.mxu0 0
    %169 = vmatpush1.bf16.msra.mxu0 0
    %170 = vmatprep.subr.bf16.mxu0 0
    %171 = vmatpush1.bf16.msra.mxu0 0
    %172 = vmatprep.mubr.bf16.mxu0 0
    %173 = vmatmul.mubr.bf16.gmra.mrb[0].mxu0 %v135
    %v174 = vpop.f32.mrb[0].mxu0
    %v175 = vadd.f32 %v114, %v174
    %v176 = vpop.f32.mrb[0].mxu0
    %v177 = vpop.f32.mrb[0].mxu0
    %v178 = vadd.f32 %v119, %v177
    %v179 = vpop.f32.mrb[0].mxu0
    %180 = vmatprep.mubr.bf16.mxu0 0
    %181 = vmatmul.mubr.bf16.gmra.mrb[0].mxu0 %v138
    %v182 = vpop.f32.mrb[0].mxu0
    %v183 = vadd.f32 %v124, %v182
    %v184 = vpop.f32.mrb[0].mxu0
    %v185 = vpop.f32.mrb[0].mxu0
    %v186 = vpop.f32.mrb[0].mxu0
    %187 = vdwg.mxu0
    %v188 = vmul.f32 %v175, %v46
    %v189 = vmul.f32 %v178, %v46
    %v190 = vmul.f32 %v183, %v46
    %191 = vst [vmem:[#allocation2] sm:$0xff] %v188
    %192 = vst [vmem:[#allocation2 + $0x8] sm:$0xff] %v189
    %193 = vst [vmem:[#allocation2 + $0x10] sm:$0xff] %v190
    %194 = vst [vmem:[#allocation4] sm:$0x1] %v31
    // Predicated region
    $region18: #{tpu_custom_call.1} parent=1 // pred_check
      _
    $region19: #{tpu_custom_call.1} parent=1 // pred_check_branch
      %196 = sbr.rel (0) target = $region21
    $region20: #{tpu_custom_call.1} parent=1 // pred_region
      %s198 = ssub.s32 384, 384
      %199 = vsyncadd [#allocation3], %s198
      %s200 = sshll.u32 [#allocation2], 4
      %s201 = int_to_ptr.vmem [resolvable:$true] %s200
      %206 = dma.vmem_to_hbm [thread:$0]  %s201, 384, %s4, [#allocation3], 128, 128, 8
    $region21: #{tpu_custom_call.1} parent=1 // pred_fallthru
      _
    // Predicated region
    $region22: #{tpu_custom_call.1} parent=1 // pred_check
      _
    $region23: #{tpu_custom_call.1} parent=1 // pred_check_branch
      %208 = sbr.rel (0) target = $region25
    $region24: #{tpu_custom_call.1} parent=1 // pred_region
      %s210 = ssub.s32 16, 16
      %211 = vsyncadd [#allocation5], %s210
      %s213 = sshll.u32 [#allocation4], 4
      %s214 = int_to_ptr.vmem [resolvable:$true] %s213
      %216 = dma.vmem_to_hbm [thread:$0]  %s214, 16, %s5, [#allocation5]
    $region25: #{tpu_custom_call.1} parent=1 // pred_fallthru
      _
    // Predicated region
    $region26: #{tpu_custom_call.1} parent=1 // pred_check
      _
    $region27: #{tpu_custom_call.1} parent=1 // pred_check_branch
      %218 = sbr.rel (0) target = $region29
    $region28: #{tpu_custom_call.1} parent=1 // pred_region
      %219 = dma.done [#allocation3], 384
    $region29: #{tpu_custom_call.1} parent=1 // pred_fallthru
      _
    // Predicated region
    $region30: #{tpu_custom_call.1} parent=1 // pred_check
      _
    $region31: #{tpu_custom_call.1} parent=1 // pred_check_branch
      %221 = sbr.rel (0) target = $region33
    $region32: #{tpu_custom_call.1} parent=1 // pred_region
      %222 = dma.done [#allocation5], 16
    $region33: #{tpu_custom_call.1} parent=1 // pred_fallthru
      _
    %223 = vsyncpa [#allocation3], 1
    %224 = vsyncpa [#allocation5], 1

</llo_original>
